<compile_context>
chip_gen: v6e
topology: v6e:2x2x1
jax: 0.10.0
libtpu: 0.0.40
codegen_flags: <defaults>
</compile_context>

<pallas_src>
import functools

import jax
import jax.numpy as jnp
from jax.experimental import pallas as pl
from jax.experimental.pallas import tpu as pltpu


def _round_up(n, m):
    return ((n + m - 1) // m) * m


def _patch_proj_kernel(x_ref, w_ref, b_ref, o_ref):
    # x_ref: (TM, K)  w_ref: (K, TN)  b_ref: (1, TN) f32  o_ref: (TM, TN)
    acc = jnp.dot(x_ref[...], w_ref[...], preferred_element_type=jnp.float32)
    # Bias add fused with the final cast (single pass over the f32 accumulator).
    o_ref[...] = (acc + b_ref[...]).astype(o_ref.dtype)


def patch_embedding_forward(x, weight, bias, patch_size, *,
                            compute_dtype=None, tm=256, tn=256):
    """Conv2d(kernel=stride=P) + flatten(2) + transpose(1, 2).

    x: (B, C, H, W); weight: (E, C, P, P); bias: (E,)  ->  (B, num_patches, E)
    """
    B, C, H, W = x.shape
    P = int(patch_size)
    E = weight.shape[0]
    out_dtype = x.dtype
    if compute_dtype is None:
        compute_dtype = x.dtype

    # Conv2d with stride == kernel and no padding drops trailing rows/cols that
    # don't form a full patch (PyTorch floor semantics) -> crop instead of assert.
    hP, wP = H // P, W // P
    num_patches = hP * wP
    x = x[:, :, : hP * P, : wP * P]

    # Patchify (reshape/transpose glue, no compute). Each patch is flattened in
    # (C, P, P) order, matching the flattened Conv2d weight.
    # TODO(synk): this still materializes one patchified copy of x; the
    # allow_input_fusion hint below lets XLA fuse it into the kernel's x input.
    xp = x.reshape(B, C, hP, P, wP, P)
    xp = xp.transpose(0, 2, 4, 1, 3, 5)
    xp = xp.reshape(B * num_patches, C * P * P).astype(compute_dtype)

    w2d = weight.reshape(E, C * P * P).T.astype(compute_dtype)  # (K, E)
    b2d = bias.astype(jnp.float32).reshape(1, E)                # f32 bias

    M, K = xp.shape

    # ---- alignment / tiling -------------------------------------------------
    # K is kept at its natural size: the (TM, K) / (K, TN) blocks span the full
    # K extent, which satisfies the (8,128) rule without padding and avoids
    # inflating x's HBM traffic for small C*P*P.
    Ep = _round_up(E, 128)              # output lane dim -> unmasked stores
    TM = min(tm, _round_up(M, 8))       # big M tile, capped for tiny problems
    Mp = _round_up(M, TM)
    TN = tn if (tn % 128 == 0 and Ep % tn == 0) else 128   # always divides Ep

    if Mp != M:
        xp = jnp.pad(xp, ((0, Mp - M), (0, 0)))
    if Ep != E:
        w2d = jnp.pad(w2d, ((0, 0), (0, Ep - E)))
        b2d = jnp.pad(b2d, ((0, 0), (0, Ep - E)))

    grid = (Mp // TM, Ep // TN)

    # VMEM note: with TM=256, TN=256, K<=a few hundred the double-buffered
    # x/w/out tiles stay well under the 32 MiB default scoped VMEM even on v7x
    # (64 MiB physical); raise vmem_limit_bytes only if tm/tn are pushed higher.
    out = pl.pallas_call(
        _patch_proj_kernel,
        out_shape=jax.ShapeDtypeStruct((Mp, Ep), out_dtype),
        grid_spec=pltpu.PrefetchScalarGridSpec(
            num_scalar_prefetch=0,
            grid=grid,
            in_specs=[
                pl.BlockSpec((TM, K), lambda i, j: (i, 0)),    # patch rows
                pl.BlockSpec((K, TN), lambda i, j: (0, j)),    # weight slice
                pl.BlockSpec((1, TN), lambda i, j: (0, j)),    # bias slice
            ],
            out_specs=pl.BlockSpec((TM, TN), lambda i, j: (i, j)),
        ),
        compiler_params=pltpu.CompilerParams(
            dimension_semantics=("parallel", "parallel"),
            # Hint: let XLA fuse the patchify/pad producers into the x operand.
            allow_input_fusion=(True, False, False),
        ),
    )(xp, w2d, b2d)

    out = out[:M, :E]
    return out.reshape(B, num_patches, E)


if __name__ == "__main__":
    # Small shapes consistent with the module's forward.
    B, C, H, W = 2, 4, 16, 16
    P = 4
    E = 32  # emb_dim

    key = jax.random.PRNGKey(0)
    kx, kw, kb = jax.random.split(key, 3)

    x = jax.random.normal(kx, (B, C, H, W), dtype=jnp.float32)

    # Deterministic Conv2d-style init: uniform(-1/sqrt(fan_in), 1/sqrt(fan_in)).
    fan_in = C * P * P
    bound = 1.0 / jnp.sqrt(jnp.float32(fan_in))
    weight = jax.random.uniform(kw, (E, C, P, P), jnp.float32, -bound, bound)
    bias = jax.random.uniform(kb, (E,), jnp.float32, -bound, bound)

    # Pure-JAX reference of the same forward (patchify + einsum + bias).
    hP, wP = H // P, W // P
    xref = x.reshape(B, C, hP, P, wP, P).transpose(0, 2, 4, 1, 3, 5)
    xref = xref.reshape(B, hP * wP, C * P * P)
    ref = jnp.einsum("bnk,ek->bne", xref, weight.reshape(E, -1)) + bias[None, None, :]

    # f32 compute path (strict check).
    fwd_f32 = jax.jit(functools.partial(patch_embedding_forward, patch_size=P))
    out = jax.block_until_ready(fwd_f32(x, weight, bias))
    assert out.shape == (B, hP * wP, E)
    assert jnp.allclose(out, ref, atol=1e-5, rtol=1e-5)

    # bf16 MXU path (f32 accumulation), looser tolerance.
    fwd_bf16 = jax.jit(functools.partial(
        patch_embedding_forward, patch_size=P, compute_dtype=jnp.bfloat16))
    out_bf16 = jax.block_until_ready(fwd_bf16(x, weight, bias))
    assert out_bf16.shape == (B, hP * wP, E)
    assert jnp.allclose(out_bf16, ref, atol=5e-2, rtol=5e-2)

    print("KERNEL_OK")
</pallas_src>

<mosaic_0001>
module attributes {stable_mosaic.version = 11 : i64} {
  func.func @_patch_proj_kernel(%arg0: i32, %arg1: i32, %arg2: memref<32x64xf32, #tpu.memory_space<vmem>>, %arg3: memref<64x128xf32, #tpu.memory_space<vmem>>, %arg4: memref<1x128xf32, #tpu.memory_space<vmem>>, %arg5: memref<32x128xf32, #tpu.memory_space<vmem>>) attributes {dimension_semantics = [#tpu.dimension_semantics<parallel>, #tpu.dimension_semantics<parallel>], iteration_bounds = array<i64: 1, 1>, scalar_prefetch = 0 : i64, scratch_operands = 0 : i64, tpu.core_type = #tpu.core_type<tc>, window_params = [{transform_indices = @transform_0, window_bounds = array<i64: 32, 64>}, {transform_indices = @transform_1, window_bounds = array<i64: 64, 128>}, {transform_indices = @transform_2, window_bounds = array<i64: 1, 128>}, {transform_indices = @transform_3, window_bounds = array<i64: 32, 128>}]} {
    %c0 = arith.constant 0 : index
    %c0_0 = arith.constant 0 : index
    %0 = vector.load %arg2[%c0, %c0_0] : memref<32x64xf32, #tpu.memory_space<vmem>>, vector<32x64xf32>
    %c0_1 = arith.constant 0 : index
    %c0_2 = arith.constant 0 : index
    %1 = vector.load %arg3[%c0_1, %c0_2] : memref<64x128xf32, #tpu.memory_space<vmem>>, vector<64x128xf32>
    %cst = arith.constant dense<0.000000e+00> : vector<32x128xf32>
    %2 = tpu.matmul %0, %1, %cst {dimension_numbers = #tpu.dot_dimension_numbers<[1], [0], [0], [1], [0, 0, 1, 1], [], []>} : vector<32x64xf32>, vector<64x128xf32>, vector<32x128xf32> -> vector<32x128xf32>
    %c0_3 = arith.constant 0 : index
    %c0_4 = arith.constant 0 : index
    %3 = vector.load %arg4[%c0_3, %c0_4] : memref<1x128xf32, #tpu.memory_space<vmem>>, vector<1x128xf32>
    %4 = vector.broadcast %3 : vector<1x128xf32> to vector<32x128xf32>
    %5 = arith.addf %2, %4 : vector<32x128xf32>
    %c0_5 = arith.constant 0 : index
    %c0_6 = arith.constant 0 : index
    %6 = vector.load %arg5[%c0_5, %c0_6] : memref<32x128xf32, #tpu.memory_space<vmem>>, vector<32x128xf32>
    tpu.vector_store %arg5[%c0_5, %c0_6], %5 {strides = array<i32>} : memref<32x128xf32, #tpu.memory_space<vmem>>, vector<32x128xf32>,
    return
  }
  func.func @transform_0(%arg0: i32, %arg1: i32) -> (i32, i32) {
    %c0_i32 = arith.constant 0 : i32
    %c0_i32_0 = arith.constant 0 : i32
    return %arg0, %c0_i32 : i32, i32
  }
  func.func @transform_1(%arg0: i32, %arg1: i32) -> (i32, i32) {
    %c0_i32 = arith.constant 0 : i32
    %c0_i32_0 = arith.constant 0 : i32
    return %c0_i32, %arg1 : i32, i32
  }
  func.func @transform_2(%arg0: i32, %arg1: i32) -> (i32, i32) {
    %c0_i32 = arith.constant 0 : i32
    %c0_i32_0 = arith.constant 0 : i32
    return %c0_i32, %arg1 : i32, i32
  }
  func.func @transform_3(%arg0: i32, %arg1: i32) -> (i32, i32) {
    %c0_i32 = arith.constant 0 : i32
    return %arg0, %arg1 : i32, i32
  }
}

</mosaic_0001>

<llo_original>
// kernel: patch_embedding_forward.1
$region0: #{patch_embedding_forward.1}
  #allocation0 [shape = 'u32[]', space=smem, size = 0x4, offset = 0x4, fixed_abs, tag = 'smem constant byte address 0x4 - core index']
  #allocation1 [shape = 'u32[144,128]{1,0:T(1,128)}', space=vmem, size = 0x12000, scoped, tag = 'internal scratch']
  %s0 = inlined_call_operand.vmem [shape: f32[32,64], index: 0, kind: input, shape index: {}]
  %s1 = inlined_call_operand.vmem [shape: f32[64,128], index: 1, kind: input, shape index: {}]
  %s2 = inlined_call_operand.vmem [shape: f32[1,128], index: 2, kind: input, shape index: {}]
  %s3 = inlined_call_operand.hbm [shape: f32[32,128], index: 3, kind: output, shape index: {}]
  %s4 = sld [smem:[#allocation0]]
  $region22: #{patch_embedding_forward.1} parent=0
    _
  %s6 = ssub.s32 1, %s4
  %s7 = scalar_select 0, %s6, %s4
  $region1: #{patch_embedding_forward.1} parent=0
    #allocation2 [shape = 'u8[16384]{0}', space=vmem, size = 0x4000, scoped, tag = 'output window, operand 0, single buffered']
    #allocation3 [shape = 's32[1]{0}', space=sflag, size = 0x4, scoped, tag = 'scoped memory for patch_embedding_forward.1']
    %8 = vsyncpa [#allocation3], 0
    // Predicated region
    $region2: #{patch_embedding_forward.1} parent=1 // pred_check
      _
    $region3: #{patch_embedding_forward.1} parent=1 // pred_check_branch
      %10 = sbr.rel (0) target = $region5
    $region4: #{patch_embedding_forward.1} parent=1 // pred_region
      _
    $region5: #{patch_embedding_forward.1} parent=1 // pred_fallthru
      _
    // Predicated region
    $region6: #{patch_embedding_forward.1} parent=1 // pred_check
      _
    $region7: #{patch_embedding_forward.1} parent=1 // pred_check_branch
      %12 = sbr.rel (0) target = $region9
    $region8: #{patch_embedding_forward.1} parent=1 // pred_region
      _
    $region9: #{patch_embedding_forward.1} parent=1 // pred_fallthru
      _
    // Predicated region
    $region10: #{patch_embedding_forward.1} parent=1 // pred_check
      _
    $region11: #{patch_embedding_forward.1} parent=1 // pred_check_branch
      %14 = sbr.rel (0) target = $region13
    $region12: #{patch_embedding_forward.1} parent=1 // pred_region
      _
    $region13: #{patch_embedding_forward.1} parent=1 // pred_fallthru
      _
    %v15 = vld [vmem:[%s0] sm:$0xff]
    %v16 = vld [vmem:[%s0 + $0x8] sm:$0xff]
    %v17 = vld [vmem:[%s0 + $0x10] sm:$0xff]
    %v18 = vld [vmem:[%s0 + $0x18] sm:$0xff]
    %v19 = vld [vmem:[%s1] sm:$0xff]
    %v20 = vld [vmem:[%s1 + $0x8] sm:$0xff]
    %v21 = vld [vmem:[%s1 + $0x10] sm:$0xff]
    %v22 = vld [vmem:[%s1 + $0x18] sm:$0xff]
    %v23 = vld [vmem:[%s1 + $0x20] sm:$0xff]
    %v24 = vld [vmem:[%s1 + $0x28] sm:$0xff]
    %v25 = vld [vmem:[%s1 + $0x30] sm:$0xff]
    %v26 = vld [vmem:[%s1 + $0x38] sm:$0xff]
    %v27 = vld [vmem:[%s2] sm:$0x1]
    %v29 = vlaneseq
    %v30 = vshrl.u32 %v29, 7
    %v31 = vsub.s32 0, %v30
    %v32 = vrot.slane %v27, %v31
    %vm34 = vcmask 523264
    %v36 = vsel %vm34, %v15, 0
    %v39 = vsel %vm34, %v16, 0
    %v42 = vsel %vm34, %v17, 0
    %v45 = vsel %vm34, %v18, 0
    %47 = vmatprep.subr.mxu0 0.0
    %48 = vmatpush1.msra.mxu0 0.0
    %49 = vmatprep.subr.mxu0 0.0
    %50 = vmatpush1.msra.mxu0 0.0
    %51 = vmatprep.subr.mxu0 0.0
    %52 = vmatpush1.msra.mxu0 0.0
    %53 = vmatprep.subr.mxu0 0.0
    %54 = vmatpush1.msra.mxu0 0.0
    %55 = vmatprep.subr.mxu0 0.0
    %56 = vmatpush1.msra.mxu0 0.0
    %57 = vmatprep.subr.mxu0 0.0
    %58 = vmatpush1.msra.mxu0 0.0
    %59 = vmatprep.subr.mxu0 0.0
    %60 = vmatpush1.msra.mxu0 0.0
    %61 = vmatprep.subr.mxu0 0.0
    %62 = vmatpush1.msra.mxu0 0.0
    %63 = vmatprep.subr.mxu0 0.0
    %64 = vmatpush1.msra.mxu0 %v26
    %65 = vmatprep.subr.mxu0 0.0
    %66 = vmatpush1.msra.mxu0 %v25
    %67 = vmatprep.subr.mxu0 0.0
    %68 = vmatpush1.msra.mxu0 %v24
    %69 = vmatprep.subr.mxu0 0.0
    %70 = vmatpush1.msra.mxu0 %v23
    %71 = vmatprep.subr.mxu0 0.0
    %72 = vmatpush1.msra.mxu0 %v22
    %73 = vmatprep.subr.mxu0 0.0
    %74 = vmatpush1.msra.mxu0 %v21
    %75 = vmatprep.subr.mxu0 0.0
    %76 = vmatpush1.msra.mxu0 %v20
    %77 = vmatprep.subr.mxu0 0.0
    %78 = vmatpush1.msra.mxu0 %v19
    %79 = vmatprep.subr.mxu0 0.0
    %80 = vmatpush2.msra.mxu0 0.0
    %81 = vmatprep.subr.mxu0 0.0
    %82 = vmatpush2.msra.mxu0 0.0
    %83 = vmatprep.subr.mxu0 0.0
    %84 = vmatpush2.msra.mxu0 0.0
    %85 = vmatprep.subr.mxu0 0.0
    %86 = vmatpush2.msra.mxu0 0.0
    %87 = vmatprep.subr.mxu0 0.0
    %88 = vmatpush2.msra.mxu0 0.0
    %89 = vmatprep.subr.mxu0 0.0
    %90 = vmatpush2.msra.mxu0 0.0
    %91 = vmatprep.subr.mxu0 0.0
    %92 = vmatpush2.msra.mxu0 0.0
    %93 = vmatprep.subr.mxu0 0.0
    %94 = vmatpush2.msra.mxu0 0.0
    %95 = vmatprep.subr.mxu0 0.0
    %96 = vmatpush2.msra.mxu0 0.0
    %97 = vmatprep.subr.mxu0 0.0
    %98 = vmatpush2.msra.mxu0 0.0
    %99 = vmatprep.subr.mxu0 0.0
    %100 = vmatpush2.msra.mxu0 0.0
    %101 = vmatprep.subr.mxu0 0.0
    %102 = vmatpush2.msra.mxu0 0.0
    %103 = vmatprep.subr.mxu0 0.0
    %104 = vmatpush2.msra.mxu0 0.0
    %105 = vmatprep.subr.mxu0 0.0
    %106 = vmatpush2.msra.mxu0 0.0
    %107 = vmatprep.subr.mxu0 0.0
    %108 = vmatpush2.msra.mxu0 0.0
    %109 = vmatprep.subr.mxu0 0.0
    %110 = vmatpush2.msra.mxu0 0.0
    %111 = vmatprep.mubr.f32.mxu0 0.0
    %112 = vmatmul.mubr.f32.gmra.mxu0 %v36
    %v113 = vpop.f32.mrf.mxu0
    %v114 = vadd.f32 %v32, %v113
    %v115 = vpop.f32.mrf.mxu0
    %116 = vmatprep.mubr.f32.mxu0 0.0
    %117 = vmatmul.mubr.f32.gmra.mxu0 %v39
    %v118 = vpop.f32.mrf.mxu0
    %v119 = vadd.f32 %v32, %v118
    %v120 = vpop.f32.mrf.mxu0
    %121 = vmatprep.mubr.f32.mxu0 0.0
    %122 = vmatmul.mubr.f32.gmra.mxu0 %v42
    %v123 = vpop.f32.mrf.mxu0
    %v124 = vadd.f32 %v32, %v123
    %v125 = vpop.f32.mrf.mxu0
    %126 = vmatprep.mubr.f32.mxu0 0.0
    %127 = vmatmul.mubr.f32.gmra.mxu0 %v45
    %v128 = vpop.f32.mrf.mxu0
    %v129 = vadd.f32 %v32, %v128
    %v130 = vpop.f32.mrf.mxu0
    %131 = vdwg.mxu0
    %132 = vst [vmem:[#allocation2] sm:$0xff] %v114
    %133 = vst [vmem:[#allocation2 + $0x8] sm:$0xff] %v119
    %134 = vst [vmem:[#allocation2 + $0x10] sm:$0xff] %v124
    %135 = vst [vmem:[#allocation2 + $0x18] sm:$0xff] %v129
    // Predicated region
    $region14: #{patch_embedding_forward.1} parent=1 // pred_check
      _
    $region15: #{patch_embedding_forward.1} parent=1 // pred_check_branch
      %137 = sbr.rel (0) target = $region17
    $region16: #{patch_embedding_forward.1} parent=1 // pred_region
      %s139 = ssub.s32 512, 512
      %140 = vsyncadd [#allocation3], %s139
      %s141 = sshll.u32 [#allocation2], 4
      %s142 = int_to_ptr.vmem [resolvable:$true] %s141
      %147 = dma.vmem_to_hbm [thread:$0]  %s142, 512, %s3, [#allocation3], 128, 128, 8
    $region17: #{patch_embedding_forward.1} parent=1 // pred_fallthru
      _
    // Predicated region
    $region18: #{patch_embedding_forward.1} parent=1 // pred_check
      _
    $region19: #{patch_embedding_forward.1} parent=1 // pred_check_branch
      %149 = sbr.rel (0) target = $region21
    $region20: #{patch_embedding_forward.1} parent=1 // pred_region
      %150 = dma.done [#allocation3], 512
    $region21: #{patch_embedding_forward.1} parent=1 // pred_fallthru
      _
    %151 = vsyncpa [#allocation3], 1

</llo_original>
